<compile_context>
chip_gen: v7x
topology: tpu7x:2x2x1
jax: 0.10.0
libtpu: 0.0.40
codegen_flags: <defaults>
</compile_context>

<pallas_src>
import jax
import jax.numpy as jnp
from jax.experimental import pallas as pl
from jax.experimental.pallas import tpu as pltpu

_LANE = 128
_SUBLANE = 8


def _period_adaptation_kernel(data_ref, w_ref, b_ref, mean_ref, var_ref):
    # data_ref : (tm, C)  VMEM  rows of the flattened input (native dtype)
    # w_ref    : (1, C)   VMEM  fc1.weight (PyTorch layout (out=1, in=C))
    # b_ref    : (1,)     SMEM  fc1.bias
    # mean_ref : (1, tm)  VMEM  lane-dense per-row sigmoid(x)
    # var_ref  : (1, tm)  VMEM  lane-dense per-row |x - sigmoid(x)|
    d = data_ref[...]                        # fed to the MXU as-is (no up-cast)
    w = w_ref[...].astype(d.dtype)           # (1, C), tiny
    b = b_ref[0].astype(jnp.float32)

    # x[0, r] = sum_c w[0, c] * d[r, c] + b   ->  (1, tm), lane-dense.
    # "NT" contraction over the last dim of both operands (same structure as
    # q @ k^T in attention kernels): natively supported by the MXU, no
    # materialized transpose of the big (tm, C) data tile.
    x = jax.lax.dot_general(
        w, d,
        dimension_numbers=(((1,), (1,)), ((), ())),
        preferred_element_type=jnp.float32,
    ) + b                                    # (1, tm) float32

    mean = jax.nn.sigmoid(x)
    # variance = sqrt(mean((x - mean)^2, dim=2, keepdim)); dim 2 has size 1,
    # so the mean is an identity and the whole expression equals |x - mean|.
    var = jnp.abs(x - mean)

    mean_ref[...] = mean.astype(mean_ref.dtype)
    var_ref[...] = var.astype(var_ref.dtype)


def _round_up(x, m):
    return -(-x // m) * m


def _tile_vmem_bytes(tm, C, itemsize):
    """VMEM footprint of the double-buffered pipeline tiles.
    The (tm, C) input tile is lane-padded to 128 lanes; the (1, tm) outputs are
    sublane-padded to 8 rows (f32)."""
    inp = 2 * tm * max(C, _LANE) * itemsize          # data, double-buffered
    out = 2 * 2 * _SUBLANE * tm * 4                  # mean + var, double-buffered
    wgt = 2 * _SUBLANE * _LANE * 4                   # resident weight tile
    return inp + out + wgt


def _choose_tm(M, C, itemsize, *, tm_max, vmem_tile_budget):
    """Row tile: as large as the VMEM budget allows (HBM-bound kernel -> bigger
    tiles amortize the fixed per-step pipeline overhead), a multiple of 128
    when tiled (sublane alignment + lane-dense (1, tm) output blocks), and kept
    to >= 2 / preferably an even number of blocks so the 'parallel' grid axis
    splits evenly across v7x's two TensorCores."""
    if M <= 1024:
        # Tiny problem: one full-extent block (bypasses the (8,128) constraint).
        return M

    per_row = 2 * max(C, _LANE) * itemsize + 2 * 2 * _SUBLANE * 4
    tm = min(tm_max, vmem_tile_budget // per_row)
    tm = max(_LANE, (tm // _LANE) * _LANE)

    # Keep at least two (balanced) blocks for v7x's two TensorCores.
    tm = min(tm, _round_up(-(-M // 2), _LANE))

    # Best-effort: nudge the grid to an even block count.
    g = pl.cdiv(M, tm)
    if g > 1 and g % 2 == 1:
        tm_even = _round_up(-(-M // (g + 1)), _LANE)
        tm = max(_LANE, min(tm, tm_even))
    return tm


def period_adaptation(data, weight, bias, *, tm_max=32768,
                      vmem_tile_budget=24 * 1024 * 1024):
    """data: (B, N, C); weight: (1, C); bias: (1,).
    Returns (mean, variance), each (B, N, 1) float32 (matches the PyTorch
    module)."""
    B, N, C = data.shape
    M = B * N

    itemsize = jnp.dtype(data.dtype).itemsize
    tm = _choose_tm(M, C, itemsize, tm_max=tm_max,
                    vmem_tile_budget=vmem_tile_budget)
    grid_m = pl.cdiv(M, tm)

    data2d = data.reshape(M, C)        # contiguous reshape: free, no HBM copy
    weight2d = weight.reshape(1, C)
    bias1d = bias.reshape(1)

    out_shapes = (
        jax.ShapeDtypeStruct((1, M), jnp.float32),
        jax.ShapeDtypeStruct((1, M), jnp.float32),
    )

    vmem_limit = min(max(_tile_vmem_bytes(tm, C, itemsize) + (4 << 20),
                         16 << 20), 64 << 20)

    mean_row, var_row = pl.pallas_call(
        _period_adaptation_kernel,
        out_shape=out_shapes,
        grid_spec=pltpu.PrefetchScalarGridSpec(
            num_scalar_prefetch=0,
            grid=(grid_m,),
            in_specs=[
                pl.BlockSpec((tm, C), lambda i: (i, 0)),             # data rows
                pl.BlockSpec((1, C), lambda i: (0, 0)),              # weight (resident)
                pl.BlockSpec(memory_space=pltpu.MemorySpace.SMEM),   # bias scalar
            ],
            out_specs=[
                pl.BlockSpec((1, tm), lambda i: (0, i)),             # mean (lane-dense)
                pl.BlockSpec((1, tm), lambda i: (0, i)),             # variance (lane-dense)
            ],
        ),
        compiler_params=pltpu.CompilerParams(
            dimension_semantics=("parallel",),
            vmem_limit_bytes=vmem_limit,
        ),
    )(data2d, weight2d, bias1d)

    mean = mean_row.reshape(B, N, 1)   # (1, M) -> (B, N, 1): free reshape
    var = var_row.reshape(B, N, 1)
    return mean, var


def _reference(data, weight, bias):
    x = jnp.einsum("bnc,oc->bno", data, weight) + bias  # (B, N, 1)
    mean = jax.nn.sigmoid(x)
    var = jnp.sqrt(jnp.mean((x - mean) ** 2, axis=2, keepdims=True))
    return mean, var


if __name__ == "__main__":
    key = jax.random.PRNGKey(0)
    k_data, k_w, k_b, k_data2, k_data3 = jax.random.split(key, 5)

    # Shapes consistent with the module: batch=2, seq=8, compress_size=32.
    B, N, C = 2, 8, 32
    data = jax.random.normal(k_data, (B, N, C), dtype=jnp.float32)

    # Deterministic init mimicking nn.Linear(compress_size, 1):
    # weight (1, C), bias (1,), uniform in [-1/sqrt(C), 1/sqrt(C)].
    bound = 1.0 / jnp.sqrt(jnp.float32(C))
    weight = jax.random.uniform(k_w, (1, C), jnp.float32, -bound, bound)
    bias = jax.random.uniform(k_b, (1,), jnp.float32, -bound, bound)

    # 1) Tiny module-default shape: single full-extent block.
    mean, var = period_adaptation(data, weight, bias)
    jax.block_until_ready((mean, var))
    mean_ref, var_ref = _reference(data, weight, bias)
    assert mean.shape == (B, N, 1) and var.shape == (B, N, 1)
    assert jnp.allclose(mean, mean_ref, atol=1e-5, rtol=1e-5)
    assert jnp.allclose(var, var_ref, atol=1e-5, rtol=1e-5)

    # 2) Multi-block grid with a ragged last block (M = 1200, small forced tile):
    #    no padding copy — Pallas masks the partial block.
    B2, N2 = 4, 300
    data2 = jax.random.normal(k_data2, (B2, N2, C), dtype=jnp.float32)
    mean2, var2 = period_adaptation(data2, weight, bias, tm_max=512)
    jax.block_until_ready((mean2, var2))
    mean2_ref, var2_ref = _reference(data2, weight, bias)
    assert mean2.shape == (B2, N2, 1) and var2.shape == (B2, N2, 1)
    assert jnp.allclose(mean2, mean2_ref, atol=1e-5, rtol=1e-5)
    assert jnp.allclose(var2, var2_ref, atol=1e-5, rtol=1e-5)

    # 3) Larger case exercising the default multi-MiB tile, the even-grid
    #    nudge, the raised vmem_limit_bytes, and a ragged last block.
    B3, N3 = 1, 50000
    data3 = jax.random.normal(k_data3, (B3, N3, C), dtype=jnp.float32)
    mean3, var3 = period_adaptation(data3, weight, bias)
    jax.block_until_ready((mean3, var3))
    mean3_ref, var3_ref = _reference(data3, weight, bias)
    assert mean3.shape == (B3, N3, 1) and var3.shape == (B3, N3, 1)
    assert jnp.allclose(mean3, mean3_ref, atol=1e-5, rtol=1e-5)
    assert jnp.allclose(var3, var3_ref, atol=1e-5, rtol=1e-5)

    print("KERNEL_OK")
</pallas_src>

<mosaic_0001>
module attributes {stable_mosaic.version = 11 : i64} {
  func.func @_period_adaptation_kernel(%arg0: i32, %arg1: memref<16x32xf32, #tpu.memory_space<vmem>>, %arg2: memref<1x32xf32, #tpu.memory_space<vmem>>, %arg3: memref<1xf32, #tpu.memory_space<smem>>, %arg4: memref<1x16xf32, #tpu.memory_space<vmem>>, %arg5: memref<1x16xf32, #tpu.memory_space<vmem>>) attributes {dimension_semantics = [#tpu.dimension_semantics<parallel>], iteration_bounds = array<i64: 1>, scalar_prefetch = 0 : i64, scratch_operands = 0 : i64, tpu.core_type = #tpu.core_type<tc>, window_params = [{transform_indices = @transform_0, window_bounds = array<i64: 16, 32>}, {pipeline_mode = #tpu.pipeline_mode<synchronous>, transform_indices = @transform_1, window_bounds = array<i64: 1, 32>}, {transform_indices = @transform_2, window_bounds = array<i64: 1>}, {transform_indices = @transform_3, window_bounds = array<i64: 1, 16>}, {transform_indices = @transform_4, window_bounds = array<i64: 1, 16>}]} {
    %c0 = arith.constant 0 : index
    %c0_0 = arith.constant 0 : index
    %0 = vector.load %arg1[%c0, %c0_0] : memref<16x32xf32, #tpu.memory_space<vmem>>, vector<16x32xf32>
    %c0_1 = arith.constant 0 : index
    %c0_2 = arith.constant 0 : index
    %1 = vector.load %arg2[%c0_1, %c0_2] : memref<1x32xf32, #tpu.memory_space<vmem>>, vector<1x32xf32>
    %c0_3 = arith.constant 0 : index
    %2 = memref.load %arg3[%c0_3] : memref<1xf32, #tpu.memory_space<smem>>
    %cst = arith.constant dense<0.000000e+00> : vector<1x16xf32>
    %3 = tpu.matmul %1, %0, %cst {dimension_numbers = #tpu.dot_dimension_numbers<[1], [1], [0], [0], [0, 0, 1, 0], [], []>} : vector<1x32xf32>, vector<16x32xf32>, vector<1x16xf32> -> vector<1x16xf32>
    %4 = vector.broadcast %2 : f32 to vector<1x16xf32>
    %5 = arith.addf %3, %4 : vector<1x16xf32>
    %6 = arith.negf %5 : vector<1x16xf32>
    %7 = math.exp %6 : vector<1x16xf32>
    %cst_4 = arith.constant 1.000000e+00 : f32
    %8 = vector.broadcast %cst_4 : f32 to vector<1x16xf32>
    %9 = arith.addf %8, %7 : vector<1x16xf32>
    %10 = arith.divf %8, %9 : vector<1x16xf32>
    %11 = arith.subf %5, %10 : vector<1x16xf32>
    %12 = math.absf %11 : vector<1x16xf32>
    %c0_5 = arith.constant 0 : index
    %c0_6 = arith.constant 0 : index
    %13 = vector.load %arg4[%c0_5, %c0_6] : memref<1x16xf32, #tpu.memory_space<vmem>>, vector<1x16xf32>
    tpu.vector_store %arg4[%c0_5, %c0_6], %10 {strides = array<i32>} : memref<1x16xf32, #tpu.memory_space<vmem>>, vector<1x16xf32>,
    %c0_7 = arith.constant 0 : index
    %c0_8 = arith.constant 0 : index
    %14 = vector.load %arg5[%c0_7, %c0_8] : memref<1x16xf32, #tpu.memory_space<vmem>>, vector<1x16xf32>
    tpu.vector_store %arg5[%c0_7, %c0_8], %12 {strides = array<i32>} : memref<1x16xf32, #tpu.memory_space<vmem>>, vector<1x16xf32>,
    return
  }
  func.func @transform_0(%arg0: i32) -> (i32, i32) {
    %c0_i32 = arith.constant 0 : i32
    %c0_i32_0 = arith.constant 0 : i32
    return %arg0, %c0_i32 : i32, i32
  }
  func.func @transform_1(%arg0: i32) -> (i32, i32) {
    %c0_i32 = arith.constant 0 : i32
    %c0_i32_0 = arith.constant 0 : i32
    %c0_i32_1 = arith.constant 0 : i32
    return %c0_i32, %c0_i32_0 : i32, i32
  }
  func.func @transform_2(%arg0: i32) -> i32 {
    %c0_i32 = arith.constant 0 : i32
    %c0_i32_0 = arith.constant 0 : i32
    return %c0_i32 : i32
  }
  func.func @transform_3(%arg0: i32) -> (i32, i32) {
    %c0_i32 = arith.constant 0 : i32
    %c0_i32_0 = arith.constant 0 : i32
    return %c0_i32, %arg0 : i32, i32
  }
  func.func @transform_4(%arg0: i32) -> (i32, i32) {
    %c0_i32 = arith.constant 0 : i32
    %c0_i32_0 = arith.constant 0 : i32
    return %c0_i32, %arg0 : i32, i32
  }
}

</mosaic_0001>

<llo_original>
// kernel: tpu_custom_call.1
$region0: #{tpu_custom_call.1}
  #allocation0 [shape = 'u32[]', space=smem, size = 0x4, offset = 0x4, fixed_abs, tag = 'smem constant byte address 0x4 - core index']
  #allocation1 [shape = 'u32[144,128]{1,0:T(1,128)}', space=vmem, size = 0x12000, scoped, tag = 'internal scratch']
  #allocation2 [shape = 'f32[1]{0:T(128)S(6)}', space=smem, size = 0x200, scoped, tag = 'scoped memory for tpu_custom_call.1']
  %s0 = inlined_call_operand.hbm [shape: f32[16,32], index: 0, kind: input, shape index: {}]
  %s1 = inlined_call_operand.vmem [shape: f32[1,32], index: 1, kind: input, shape index: {}]
  %s2 = inlined_call_operand.<no memory space> [shape: f32[1], index: 2, kind: input, shape index: {}]
  %s3 = inlined_call_operand.hbm [shape: f32[1,16], index: 3, kind: output, shape index: {0}]
  %s4 = inlined_call_operand.hbm [shape: f32[1,16], index: 4, kind: output, shape index: {1}]
  %5 = xla_tuple %s3, %s4
  %s6 = sld [smem:[#allocation0]]
  $region34: #{tpu_custom_call.1} parent=0
    _
  %s8 = ssub.s32 1, %s6
  %s9 = scalar_select 0, %s8, %s6
  %10 = sst [smem:[#allocation2]] %s2
  $region1: #{tpu_custom_call.1} parent=0
    #allocation3 [shape = 'u8[8192]{0}', space=vmem, size = 0x2000, scoped, tag = 'input window, operand 0, single buffered']
    #allocation4 [shape = 's32[1]{0}', space=sflag, size = 0x4, scoped, tag = 'scoped memory for tpu_custom_call.1']
    #allocation5 [shape = 's32[1]{0}', space=sflag, size = 0x4, scoped, tag = 'scoped memory for tpu_custom_call.1']
    #allocation6 [shape = 'u8[512]{0}', space=vmem, size = 0x400, scoped, tag = 'output window, operand 0, single buffered']
    #allocation7 [shape = 'u8[512]{0}', space=vmem, size = 0x400, scoped, tag = 'output window, operand 1, single buffered']
    #allocation8 [shape = 's32[1]{0}', space=sflag, size = 0x4, scoped, tag = 'scoped memory for tpu_custom_call.1']
    %11 = vsyncpa [#allocation4], 0
    %12 = vsyncpa [#allocation5], 0
    %13 = vsyncpa [#allocation8], 0
    // Predicated region
    $region2: #{tpu_custom_call.1} parent=1 // pred_check
      _
    $region3: #{tpu_custom_call.1} parent=1 // pred_check_branch
      %15 = sbr.rel (0) target = $region5
    $region4: #{tpu_custom_call.1} parent=1 // pred_region
      %s17 = ssub.s32 256, 256
      %18 = vsyncadd [#allocation4], %s17
      %s19 = sshll.u32 [#allocation3], 4
      %s20 = int_to_ptr.vmem [resolvable:$true] %s19
      %25 = dma.hbm_to_vmem [thread:$0]  %s0, 256, %s20, [#allocation4], 128, 128, 8
    $region5: #{tpu_custom_call.1} parent=1 // pred_fallthru
      _
    // Predicated region
    $region6: #{tpu_custom_call.1} parent=1 // pred_check
      _
    $region7: #{tpu_custom_call.1} parent=1 // pred_check_branch
      %27 = sbr.rel (0) target = $region9
    $region8: #{tpu_custom_call.1} parent=1 // pred_region
      _
    $region9: #{tpu_custom_call.1} parent=1 // pred_fallthru
      _
    // Predicated region
    $region10: #{tpu_custom_call.1} parent=1 // pred_check
      _
    $region11: #{tpu_custom_call.1} parent=1 // pred_check_branch
      %29 = sbr.rel (0) target = $region13
    $region12: #{tpu_custom_call.1} parent=1 // pred_region
      _
    $region13: #{tpu_custom_call.1} parent=1 // pred_fallthru
      _
    // Predicated region
    $region14: #{tpu_custom_call.1} parent=1 // pred_check
      _
    $region15: #{tpu_custom_call.1} parent=1 // pred_check_branch
      %31 = sbr.rel (0) target = $region17
    $region16: #{tpu_custom_call.1} parent=1 // pred_region
      %32 = dma.done [#allocation4], 256
    $region17: #{tpu_custom_call.1} parent=1 // pred_fallthru
      _
    %v33 = vld [vmem:[#allocation3] sm:$0xff]
    %v34 = vld [vmem:[#allocation3 + $0x8] sm:$0xff]
    %v35 = vld [vmem:[%s1] sm:$0x1]
    %s36 = sld [smem:[#allocation2]]
    %v37 = vstv %s36
    %vm38 = vcmask 261120
    %v40 = vsel %vm38, %v35, 0
    %v43 = vsel %vm38, %v33, 0
    %v46 = vsel %vm38, %v34, 0
    %48 = vmatprep.subr.mxu0 0.0
    %49 = vmatpush1.xpose.msra.mxu0 %v43
    %50 = vmatprep.subr.mxu0 0.0
    %51 = vmatpush1.xpose.msra.mxu0 %v46
    %52 = vmatprep.subr.mxu0 0.0
    %53 = vmatpush1.xpose.msra.mxu0 0.0
    %54 = vmatprep.subr.mxu0 0.0
    %55 = vmatpush1.xpose.msra.mxu0 0.0
    %56 = vmatprep.subr.mxu0 0.0
    %57 = vmatpush1.xpose.msra.mxu0 0.0
    %58 = vmatprep.subr.mxu0 0.0
    %59 = vmatpush1.xpose.msra.mxu0 0.0
    %60 = vmatprep.subr.mxu0 0.0
    %61 = vmatpush1.xpose.msra.mxu0 0.0
    %62 = vmatprep.subr.mxu0 0.0
    %63 = vmatpush1.xpose.msra.mxu0 0.0
    %64 = vmatprep.subr.mxu0 0.0
    %65 = vmatpush1.xpose.msra.mxu0 0.0
    %66 = vmatprep.subr.mxu0 0.0
    %67 = vmatpush1.xpose.msra.mxu0 0.0
    %68 = vmatprep.subr.mxu0 0.0
    %69 = vmatpush1.xpose.msra.mxu0 0.0
    %70 = vmatprep.subr.mxu0 0.0
    %71 = vmatpush1.xpose.msra.mxu0 0.0
    %72 = vmatprep.subr.mxu0 0.0
    %73 = vmatpush1.xpose.msra.mxu0 0.0
    %74 = vmatprep.subr.mxu0 0.0
    %75 = vmatpush1.xpose.msra.mxu0 0.0
    %76 = vmatprep.subr.mxu0 0.0
    %77 = vmatpush1.xpose.msra.mxu0 0.0
    %78 = vmatprep.subr.mxu0 0.0
    %79 = vmatpush1.xpose.msra.mxu0 0.0
    %80 = vmatprep.subr.mxu0 0.0
    %81 = vmatpush1.xpose.msra.mxu0 0.0
    %82 = vmatprep.subr.mxu0 0.0
    %83 = vmatpush1.xpose.msra.mxu0 0.0
    %84 = vmatprep.subr.mxu0 0.0
    %85 = vmatpush1.xpose.msra.mxu0 0.0
    %86 = vmatprep.subr.mxu0 0.0
    %87 = vmatpush1.xpose.msra.mxu0 0.0
    %88 = vmatprep.subr.mxu0 0.0
    %89 = vmatpush1.xpose.msra.mxu0 0.0
    %90 = vmatprep.subr.mxu0 0.0
    %91 = vmatpush1.xpose.msra.mxu0 0.0
    %92 = vmatprep.subr.mxu0 0.0
    %93 = vmatpush1.xpose.msra.mxu0 0.0
    %94 = vmatprep.subr.mxu0 0.0
    %95 = vmatpush1.xpose.msra.mxu0 0.0
    %96 = vmatprep.subr.mxu0 0.0
    %97 = vmatpush1.xpose.msra.mxu0 0.0
    %98 = vmatprep.subr.mxu0 0.0
    %99 = vmatpush1.xpose.msra.mxu0 0.0
    %100 = vmatprep.subr.mxu0 0.0
    %101 = vmatpush1.xpose.msra.mxu0 0.0
    %102 = vmatprep.subr.mxu0 0.0
    %103 = vmatpush1.xpose.msra.mxu0 0.0
    %104 = vmatprep.subr.mxu0 0.0
    %105 = vmatpush1.xpose.msra.mxu0 0.0
    %106 = vmatprep.subr.mxu0 0.0
    %107 = vmatpush1.xpose.msra.mxu0 0.0
    %108 = vmatprep.subr.mxu0 0.0
    %109 = vmatpush1.xpose.msra.mxu0 0.0
    %110 = vmatprep.subr.mxu0 0.0
    %111 = vmatpush1.xpose.msra.mxu0 0.0
    %112 = vmatprep.mubr.f32.mxu0 0.0
    %113 = vmatmul.mubr.f32.gmra.mrb[0].mxu0 %v40
    %v114 = vpop.f32.mrb[0].mxu0
    %v115 = vadd.f32 %v37, %v114
    %v116 = vpop.f32.mrb[0].mxu0
    %117 = vdwg.mxu0
    %v118 = vxor.u32 %v115, 2147483648
    %v119 = vmul.f32 %v118, 1.442695
    %v120 = vpow.pop %v119
    %v121 = vadd.f32 %v120, 1.0
    %v122 = vrcp.pop %v121
    %v123 = vmul.f32 1.0, %v122
    %v124 = vsub.f32 %v115, %v123
    %v125 = vand.u32 2147483647, %v124
    %vm126 = vcmask 122880
    %127 = vst.msk [vmem:[#allocation6] sm:$0x1] %vm126, %v123
    %128 = vst.msk [vmem:[#allocation7] sm:$0x1] %vm126, %v125
    // Predicated region
    $region18: #{tpu_custom_call.1} parent=1 // pred_check
      _
    $region19: #{tpu_custom_call.1} parent=1 // pred_check_branch
      %130 = sbr.rel (0) target = $region21
    $region20: #{tpu_custom_call.1} parent=1 // pred_region
      %s132 = ssub.s32 16, 16
      %133 = vsyncadd [#allocation5], %s132
      %s135 = sshll.u32 [#allocation6], 4
      %s136 = int_to_ptr.vmem [resolvable:$true] %s135
      %138 = dma.vmem_to_hbm [thread:$0]  %s136, 16, %s3, [#allocation5]
    $region21: #{tpu_custom_call.1} parent=1 // pred_fallthru
      _
    // Predicated region
    $region22: #{tpu_custom_call.1} parent=1 // pred_check
      _
    $region23: #{tpu_custom_call.1} parent=1 // pred_check_branch
      %140 = sbr.rel (0) target = $region25
    $region24: #{tpu_custom_call.1} parent=1 // pred_region
      %s142 = ssub.s32 16, 16
      %143 = vsyncadd [#allocation8], %s142
      %s145 = sshll.u32 [#allocation7], 4
      %s146 = int_to_ptr.vmem [resolvable:$true] %s145
      %148 = dma.vmem_to_hbm [thread:$0]  %s146, 16, %s4, [#allocation8]
    $region25: #{tpu_custom_call.1} parent=1 // pred_fallthru
      _
    // Predicated region
    $region26: #{tpu_custom_call.1} parent=1 // pred_check
      _
    $region27: #{tpu_custom_call.1} parent=1 // pred_check_branch
      %150 = sbr.rel (0) target = $region29
    $region28: #{tpu_custom_call.1} parent=1 // pred_region
      %151 = dma.done [#allocation5], 16
    $region29: #{tpu_custom_call.1} parent=1 // pred_fallthru
      _
    // Predicated region
    $region30: #{tpu_custom_call.1} parent=1 // pred_check
      _
    $region31: #{tpu_custom_call.1} parent=1 // pred_check_branch
      %153 = sbr.rel (0) target = $region33
    $region32: #{tpu_custom_call.1} parent=1 // pred_region
      %154 = dma.done [#allocation8], 16
    $region33: #{tpu_custom_call.1} parent=1 // pred_fallthru
      _
    %155 = vsyncpa [#allocation4], 1
    %156 = vsyncpa [#allocation5], 1
    %157 = vsyncpa [#allocation8], 1

</llo_original>
